<compile_context>
chip_gen: v5e
topology: v5e:2x2
jax: 0.10.0
libtpu: 0.0.40
codegen_flags: <defaults>
</compile_context>

<pallas_src>
import functools

import jax
import jax.numpy as jnp
from jax.experimental import pallas as pl
from jax.experimental.pallas import tpu as pltpu

LN_EPS = 1e-5                        # nn.LayerNorm default eps
_SQRT_2_OVER_PI = 0.7978845608028654


def _round_up(x, m):
    return (x + m - 1) // m * m


def _vmem_limit_bytes():
    # ~80% of physical VMEM (v5e/v6e: 128 MiB, v7x: 64 MiB); safe fallback.
    try:
        return int(pltpu.get_tpu_info().vmem_capacity_bytes * 0.8)
    except Exception:
        return 48 * 1024 * 1024


def _mlp_kernel(x_ref, gamma_ref, beta_ref, w1_ref, b1_ref, w2_ref, b2_ref,
                o_ref, xn_ref, acc_ref, *, d_actual):
    """Grid = (row tiles, hidden slices).

    NOTE: correctness of the masked LayerNorm (d_actual < padded D) relies on
    the wrapper zero-padding x, gamma and beta beyond d_actual.
    """
    k = pl.program_id(1)

    # ---- LayerNorm once per row tile; cache xn (bf16) + zero the fc2 acc ----
    @pl.when(k == 0)
    def _():
        x = x_ref[...].astype(jnp.float32)                    # (TM, Dp)
        d_pad = x.shape[-1]
        inv_d = jnp.float32(1.0 / d_actual)
        if d_actual == d_pad:
            mean = jnp.mean(x, axis=-1, keepdims=True)
            centered = x - mean
        else:
            # padded lanes of x are zero, so the plain sum is already correct
            mean = jnp.sum(x, axis=-1, keepdims=True) * inv_d
            lane = jax.lax.broadcasted_iota(jnp.int32, x.shape, x.ndim - 1)
            centered = jnp.where(lane < d_actual, x - mean, 0.0)
        var = jnp.sum(centered * centered, axis=-1, keepdims=True) * inv_d
        xn = centered * jax.lax.rsqrt(var + LN_EPS)
        xn = xn * gamma_ref[...] + beta_ref[...]              # (TM, Dp) f32
        xn_ref[...] = xn.astype(jnp.bfloat16)
        acc_ref[...] = jnp.zeros_like(acc_ref)

    # ---- fc1 slice (bf16 MXU, f32 accumulate) + tanh GELU (EUP) ----
    h = jnp.dot(xn_ref[...], w1_ref[...],
                preferred_element_type=jnp.float32)           # (TM, th)
    h = h + b1_ref[...]
    h = 0.5 * h * (1.0 + jnp.tanh(_SQRT_2_OVER_PI * (h + 0.044715 * h * h * h)))

    # ---- fc2 slice (bf16 MXU), accumulate f32 partials over hidden slices ----
    acc_ref[...] += jnp.dot(h.astype(jnp.bfloat16), w2_ref[...],
                            preferred_element_type=jnp.float32)

    # Dropout (p=0.1) is identity at inference time.
    # ---- finalize: bias + residual (re-read x, short live range) + store ----
    @pl.when(k == pl.num_programs(1) - 1)
    def _():
        y = acc_ref[...] + b2_ref[...] + x_ref[...].astype(jnp.float32)
        o_ref[...] = y.astype(o_ref.dtype)


def prepare_params(gamma, beta, w1, b1, w2, b2):
    """One-time parameter prep (pad to lane multiples of 128, cast weights to
    bf16).  Hoisted out of the per-call forward so no pad/cast HBM traffic is
    paid on every invocation.  w1: (in, hidden), w2: (hidden, out=in)."""
    in_dim, hidden_dim = w1.shape
    out_dim = w2.shape[1]
    assert out_dim == in_dim, "use_residual=True requires in_dim == out_dim"
    d_pad = _round_up(in_dim, 128)
    h_pad = _round_up(hidden_dim, 128)

    gamma_p = jnp.pad(gamma.reshape(1, in_dim).astype(jnp.float32),
                      ((0, 0), (0, d_pad - in_dim)))
    beta_p = jnp.pad(beta.reshape(1, in_dim).astype(jnp.float32),
                     ((0, 0), (0, d_pad - in_dim)))
    w1_p = jnp.pad(w1, ((0, d_pad - in_dim),
                        (0, h_pad - hidden_dim))).astype(jnp.bfloat16)
    b1_p = jnp.pad(b1.reshape(1, hidden_dim).astype(jnp.float32),
                   ((0, 0), (0, h_pad - hidden_dim)))
    w2_p = jnp.pad(w2, ((0, h_pad - hidden_dim),
                        (0, d_pad - out_dim))).astype(jnp.bfloat16)
    b2_p = jnp.pad(b2.reshape(1, out_dim).astype(jnp.float32),
                   ((0, 0), (0, d_pad - out_dim)))
    return gamma_p, beta_p, w1_p, b1_p, w2_p, b2_p


@functools.partial(jax.jit, static_argnames=("block_rows", "hidden_block"))
def mlp_forward(x, gamma_p, beta_p, w1_p, b1_p, w2_p, b2_p, *,
                block_rows=256, hidden_block=512):
    """x: (..., in_dim). Params must come from prepare_params (pre-padded)."""
    orig_shape = x.shape
    in_dim = orig_shape[-1]
    d_pad, h_pad = w1_p.shape
    assert w2_p.shape == (h_pad, d_pad)
    assert in_dim <= d_pad

    x2d = x.reshape(-1, in_dim)
    n_rows = x2d.shape[0]

    # Row tile: minimize dead-padding rows; keep >= 2 row steps when the input
    # is big enough so v7x's 2 TensorCores both get work on the parallel axis.
    n_steps = pl.cdiv(n_rows, block_rows)
    if n_rows >= 32:
        n_steps = max(n_steps, 2)
    tm = max(16, _round_up(pl.cdiv(n_rows, n_steps), 16))
    n_pad = _round_up(n_rows, tm)

    # Hidden slice: largest multiple of 128 <= hidden_block that divides h_pad.
    th = min(_round_up(hidden_block, 128), h_pad)
    while h_pad % th:
        th -= 128

    x2d = jnp.pad(x2d, ((0, n_pad - n_rows), (0, d_pad - in_dim)))

    grid = (n_pad // tm, h_pad // th)
    kernel = functools.partial(_mlp_kernel, d_actual=in_dim)

    # Advisory cost hint so XLA schedules/overlaps this adapter call sensibly.
    bytes_weights = 2 * (2 * d_pad * h_pad) * (n_pad // tm)   # bf16, per row tile
    bytes_act = 2 * n_pad * d_pad * x.dtype.itemsize
    cost = pl.CostEstimate(
        flops=4 * n_pad * d_pad * h_pad,
        transcendentals=n_pad * h_pad,
        bytes_accessed=bytes_act + bytes_weights)

    out2d = pl.pallas_call(
        kernel,
        out_shape=jax.ShapeDtypeStruct((n_pad, d_pad), x.dtype),
        grid=grid,
        in_specs=[
            pl.BlockSpec((tm, d_pad), lambda i, k: (i, 0)),    # x (resident over k)
            pl.BlockSpec((1, d_pad), lambda i, k: (0, 0)),     # gamma
            pl.BlockSpec((1, d_pad), lambda i, k: (0, 0)),     # beta
            pl.BlockSpec((d_pad, th), lambda i, k: (0, k)),    # w1 slice (bf16)
            pl.BlockSpec((1, th), lambda i, k: (0, k)),        # b1 slice
            pl.BlockSpec((th, d_pad), lambda i, k: (k, 0)),    # w2 slice (bf16)
            pl.BlockSpec((1, d_pad), lambda i, k: (0, 0)),     # b2
        ],
        out_specs=pl.BlockSpec((tm, d_pad), lambda i, k: (i, 0)),
        scratch_shapes=[
            pltpu.VMEM((tm, d_pad), jnp.bfloat16),             # cached LN output
            pltpu.VMEM((tm, d_pad), jnp.float32),              # fc2 accumulator
        ],
        compiler_params=pltpu.CompilerParams(
            dimension_semantics=("parallel", "arbitrary"),
            vmem_limit_bytes=_vmem_limit_bytes()),
        cost_estimate=cost,
    )(x2d, gamma_p, beta_p, w1_p, b1_p, w2_p, b2_p)

    return out2d[:n_rows, :in_dim].reshape(orig_shape)


def init_params(key, in_dim, hidden_dim, out_dim):
    """Deterministic synthetic init (mimics shapes of the PyTorch module)."""
    k1, k2, k3, k4 = jax.random.split(key, 4)
    # LayerNorm
    gamma = jnp.ones((1, in_dim), jnp.float32)
    beta = jnp.zeros((1, in_dim), jnp.float32)
    # fc1: PyTorch weight is (hidden, in); store transposed (in, hidden)
    lim1 = 1.0 / jnp.sqrt(in_dim)
    w1 = jax.random.uniform(k1, (in_dim, hidden_dim), jnp.float32, -lim1, lim1)
    b1 = jax.random.uniform(k2, (1, hidden_dim), jnp.float32, -lim1, lim1)
    # fc2: PyTorch weight is (out, hidden); store transposed (hidden, out)
    lim2 = 1.0 / jnp.sqrt(hidden_dim)
    w2 = jax.random.uniform(k3, (hidden_dim, out_dim), jnp.float32, -lim2, lim2)
    b2 = jax.random.uniform(k4, (1, out_dim), jnp.float32, -lim2, lim2)
    return gamma, beta, w1, b1, w2, b2


def reference_forward(x, gamma, beta, w1, b1, w2, b2):
    """Pure-JAX f32 reference (exact-erf GELU, eval-mode dropout = identity)."""
    mean = jnp.mean(x, axis=-1, keepdims=True)
    var = jnp.mean((x - mean) ** 2, axis=-1, keepdims=True)
    xn = (x - mean) / jnp.sqrt(var + LN_EPS)
    xn = xn * gamma[0] + beta[0]
    h = xn @ w1 + b1[0]
    h = 0.5 * h * (1.0 + jax.lax.erf(h / jnp.sqrt(2.0)))
    y = h @ w2 + b2[0]
    return y + x


if __name__ == "__main__":
    # use_residual=True  =>  in_dim == out_dim
    batch, seq, in_dim, hidden_dim = 2, 8, 32, 64
    out_dim = in_dim

    key = jax.random.PRNGKey(0)
    kx, kp = jax.random.split(key)
    x = jax.random.normal(kx, (batch, seq, in_dim), jnp.float32)
    params = init_params(kp, in_dim, hidden_dim, out_dim)

    # One-time parameter prep (pad + bf16 cast hoisted out of the forward).
    padded = prepare_params(*params)
    padded = jax.block_until_ready(padded)

    out = mlp_forward(x, *padded, block_rows=256, hidden_block=512)
    out = jax.block_until_ready(out)

    ref = reference_forward(x, *params)
    assert out.shape == (batch, seq, in_dim)
    # bf16 MXU operands + tanh-approx GELU => allow ~1e-2-level drift vs the
    # pure-f32 erf reference.
    assert jnp.allclose(out, ref, atol=5e-2, rtol=5e-2), (
        float(jnp.max(jnp.abs(out - ref))))

    print("KERNEL_OK")
</pallas_src>

<mosaic_0001>
module attributes {stable_mosaic.version = 11 : i64} {
  func.func @_mlp_kernel(%arg0: i32, %arg1: i32, %arg2: memref<16x128xf32, #tpu.memory_space<vmem>>, %arg3: memref<1x128xf32, #tpu.memory_space<vmem>>, %arg4: memref<1x128xf32, #tpu.memory_space<vmem>>, %arg5: memref<128x128xbf16, #tpu.memory_space<vmem>>, %arg6: memref<1x128xf32, #tpu.memory_space<vmem>>, %arg7: memref<128x128xbf16, #tpu.memory_space<vmem>>, %arg8: memref<1x128xf32, #tpu.memory_space<vmem>>, %arg9: memref<16x128xf32, #tpu.memory_space<vmem>>, %arg10: memref<16x128xbf16, #tpu.memory_space<vmem>>, %arg11: memref<16x128xf32, #tpu.memory_space<vmem>>) attributes {dimension_semantics = [#tpu.dimension_semantics<parallel>, #tpu.dimension_semantics<arbitrary>], iteration_bounds = array<i64: 1, 1>, scalar_prefetch = 0 : i64, scratch_operands = 2 : i64, tpu.core_type = #tpu.core_type<tc>, window_params = [{transform_indices = @transform_0, window_bounds = array<i64: 16, 128>}, {pipeline_mode = #tpu.pipeline_mode<synchronous>, transform_indices = @transform_1, window_bounds = array<i64: 1, 128>}, {pipeline_mode = #tpu.pipeline_mode<synchronous>, transform_indices = @transform_2, window_bounds = array<i64: 1, 128>}, {transform_indices = @transform_3, window_bounds = array<i64: 128, 128>}, {transform_indices = @transform_4, window_bounds = array<i64: 1, 128>}, {transform_indices = @transform_5, window_bounds = array<i64: 128, 128>}, {pipeline_mode = #tpu.pipeline_mode<synchronous>, transform_indices = @transform_6, window_bounds = array<i64: 1, 128>}, {transform_indices = @transform_7, window_bounds = array<i64: 16, 128>}]} {
    %c0_i32 = arith.constant 0 : i32
    %0 = arith.cmpi eq, %arg1, %c0_i32 : i32
    %1 = arith.extui %0 : i1 to i32
    %c0_i32_0 = arith.constant 0 : i32
    %2 = arith.cmpi ne, %1, %c0_i32_0 : i32
    scf.if %2 {
      %c0_19 = arith.constant 0 : index
      %c0_20 = arith.constant 0 : index
      %31 = vector.load %arg2[%c0_19, %c0_20] : memref<16x128xf32, #tpu.memory_space<vmem>>, vector<16x128xf32>
      %cst_21 = arith.constant dense<0.000000e+00> : vector<16xf32>
      %32 = vector.multi_reduction <add>, %31, %cst_21 [1] : vector<16x128xf32> to vector<16xf32>
      %33 = vector.shape_cast %32 : vector<16xf32> to vector<16x1xf32>
      %cst_22 = arith.constant 3.125000e-02 : f32
      %34 = vector.broadcast %cst_22 : f32 to vector<16x1xf32>
      %35 = arith.mulf %33, %34 : vector<16x1xf32>
      %36 = tpu.iota {dimensions = array<i32: 1>} : vector<16x128xi32>
      %c32_i32 = arith.constant 32 : i32
      %37 = vector.broadcast %c32_i32 : i32 to vector<16x128xi32>
      %38 = arith.cmpi slt, %36, %37 : vector<16x128xi32>
      %39 = vector.broadcast %35 : vector<16x1xf32> to vector<16x128xf32>
      %40 = arith.subf %31, %39 : vector<16x128xf32>
      %cst_23 = arith.constant 0.000000e+00 : f32
      %41 = vector.broadcast %cst_23 : f32 to vector<16x128xf32>
      %42 = arith.select %38, %40, %41 : vector<16x128xi1>, vector<16x128xf32>
      %43 = arith.mulf %42, %42 : vector<16x128xf32>
      %cst_24 = arith.constant dense<0.000000e+00> : vector<16xf32>
      %44 = vector.multi_reduction <add>, %43, %cst_24 [1] : vector<16x128xf32> to vector<16xf32>
      %45 = vector.shape_cast %44 : vector<16xf32> to vector<16x1xf32>
      %cst_25 = arith.constant 3.125000e-02 : f32
      %46 = vector.broadcast %cst_25 : f32 to vector<16x1xf32>
      %47 = arith.mulf %45, %46 : vector<16x1xf32>
      %cst_26 = arith.constant 9.99999974E-6 : f32
      %48 = vector.broadcast %cst_26 : f32 to vector<16x1xf32>
      %49 = arith.addf %47, %48 : vector<16x1xf32>
      %50 = math.rsqrt %49 : vector<16x1xf32>
      %51 = vector.broadcast %50 : vector<16x1xf32> to vector<16x128xf32>
      %52 = arith.mulf %42, %51 : vector<16x128xf32>
      %c0_27 = arith.constant 0 : index
      %c0_28 = arith.constant 0 : index
      %53 = vector.load %arg3[%c0_27, %c0_28] : memref<1x128xf32, #tpu.memory_space<vmem>>, vector<1x128xf32>
      %54 = vector.broadcast %53 : vector<1x128xf32> to vector<16x128xf32>
      %55 = arith.mulf %52, %54 : vector<16x128xf32>
      %c0_29 = arith.constant 0 : index
      %c0_30 = arith.constant 0 : index
      %56 = vector.load %arg4[%c0_29, %c0_30] : memref<1x128xf32, #tpu.memory_space<vmem>>, vector<1x128xf32>
      %57 = vector.broadcast %56 : vector<1x128xf32> to vector<16x128xf32>
      %58 = arith.addf %55, %57 : vector<16x128xf32>
      %59 = arith.truncf %58 : vector<16x128xf32> to vector<16x128xbf16>
      %c0_31 = arith.constant 0 : index
      %c0_32 = arith.constant 0 : index
      %60 = vector.load %arg10[%c0_31, %c0_32] : memref<16x128xbf16, #tpu.memory_space<vmem>>, vector<16x128xbf16>
      tpu.vector_store %arg10[%c0_31, %c0_32], %59 {strides = array<i32>} : memref<16x128xbf16, #tpu.memory_space<vmem>>, vector<16x128xbf16>,
      %cst_33 = arith.constant 0.000000e+00 : f32
      %61 = vector.broadcast %cst_33 : f32 to vector<16x128xf32>
      %c0_34 = arith.constant 0 : index
      %c0_35 = arith.constant 0 : index
      %62 = vector.load %arg11[%c0_34, %c0_35] : memref<16x128xf32, #tpu.memory_space<vmem>>, vector<16x128xf32>
      tpu.vector_store %arg11[%c0_34, %c0_35], %61 {strides = array<i32>} : memref<16x128xf32, #tpu.memory_space<vmem>>, vector<16x128xf32>,
    } else {
    }
    %c0 = arith.constant 0 : index
    %c0_1 = arith.constant 0 : index
    %3 = vector.load %arg10[%c0, %c0_1] : memref<16x128xbf16, #tpu.memory_space<vmem>>, vector<16x128xbf16>
    %c0_2 = arith.constant 0 : index
    %c0_3 = arith.constant 0 : index
    %4 = vector.load %arg5[%c0_2, %c0_3] : memref<128x128xbf16, #tpu.memory_space<vmem>>, vector<128x128xbf16>
    %cst = arith.constant dense<0.000000e+00> : vector<16x128xf32>
    %5 = tpu.matmul %3, %4, %cst {dimension_numbers = #tpu.dot_dimension_numbers<[1], [0], [0], [1], [0, 0, 1, 1], [], []>} : vector<16x128xbf16>, vector<128x128xbf16>, vector<16x128xf32> -> vector<16x128xf32>
    %c0_4 = arith.constant 0 : index
    %c0_5 = arith.constant 0 : index
    %6 = vector.load %arg6[%c0_4, %c0_5] : memref<1x128xf32, #tpu.memory_space<vmem>>, vector<1x128xf32>
    %7 = vector.broadcast %6 : vector<1x128xf32> to vector<16x128xf32>
    %8 = arith.addf %5, %7 : vector<16x128xf32>
    %cst_6 = arith.constant 5.000000e-01 : f32
    %9 = vector.broadcast %cst_6 : f32 to vector<16x128xf32>
    %10 = arith.mulf %9, %8 : vector<16x128xf32>
    %cst_7 = arith.constant 4.471500e-02 : f32
    %11 = vector.broadcast %cst_7 : f32 to vector<16x128xf32>
    %12 = arith.mulf %11, %8 : vector<16x128xf32>
    %13 = arith.mulf %12, %8 : vector<16x128xf32>
    %14 = arith.mulf %13, %8 : vector<16x128xf32>
    %15 = arith.addf %8, %14 : vector<16x128xf32>
    %cst_8 = arith.constant 0.797884583 : f32
    %16 = vector.broadcast %cst_8 : f32 to vector<16x128xf32>
    %17 = arith.mulf %16, %15 : vector<16x128xf32>
    %18 = math.tanh %17 : vector<16x128xf32>
    %cst_9 = arith.constant 1.000000e+00 : f32
    %19 = vector.broadcast %cst_9 : f32 to vector<16x128xf32>
    %20 = arith.addf %19, %18 : vector<16x128xf32>
    %21 = arith.mulf %10, %20 : vector<16x128xf32>
    %c0_10 = arith.constant 0 : index
    %c0_11 = arith.constant 0 : index
    %22 = vector.load %arg11[%c0_10, %c0_11] : memref<16x128xf32, #tpu.memory_space<vmem>>, vector<16x128xf32>
    %23 = arith.truncf %21 : vector<16x128xf32> to vector<16x128xbf16>
    %c0_12 = arith.constant 0 : index
    %c0_13 = arith.constant 0 : index
    %24 = vector.load %arg7[%c0_12, %c0_13] : memref<128x128xbf16, #tpu.memory_space<vmem>>, vector<128x128xbf16>
    %cst_14 = arith.constant dense<0.000000e+00> : vector<16x128xf32>
    %25 = tpu.matmul %23, %24, %cst_14 {dimension_numbers = #tpu.dot_dimension_numbers<[1], [0], [0], [1], [0, 0, 1, 1], [], []>} : vector<16x128xbf16>, vector<128x128xbf16>, vector<16x128xf32> -> vector<16x128xf32>
    %26 = arith.addf %22, %25 : vector<16x128xf32>
    %c0_15 = arith.constant 0 : index
    %c0_16 = arith.constant 0 : index
    %27 = vector.load %arg11[%c0_15, %c0_16] : memref<16x128xf32, #tpu.memory_space<vmem>>, vector<16x128xf32>
    tpu.vector_store %arg11[%c0_15, %c0_16], %26 {strides = array<i32>} : memref<16x128xf32, #tpu.memory_space<vmem>>, vector<16x128xf32>,
    %c0_i32_17 = arith.constant 0 : i32
    %28 = arith.cmpi eq, %arg1, %c0_i32_17 : i32
    %29 = arith.extui %28 : i1 to i32
    %c0_i32_18 = arith.constant 0 : i32
    %30 = arith.cmpi ne, %29, %c0_i32_18 : i32
    scf.if %30 {
      %c0_19 = arith.constant 0 : index
      %c0_20 = arith.constant 0 : index
      %31 = vector.load %arg11[%c0_19, %c0_20] : memref<16x128xf32, #tpu.memory_space<vmem>>, vector<16x128xf32>
      %c0_21 = arith.constant 0 : index
      %c0_22 = arith.constant 0 : index
      %32 = vector.load %arg8[%c0_21, %c0_22] : memref<1x128xf32, #tpu.memory_space<vmem>>, vector<1x128xf32>
      %33 = vector.broadcast %32 : vector<1x128xf32> to vector<16x128xf32>
      %34 = arith.addf %31, %33 : vector<16x128xf32>
      %c0_23 = arith.constant 0 : index
      %c0_24 = arith.constant 0 : index
      %35 = vector.load %arg2[%c0_23, %c0_24] : memref<16x128xf32, #tpu.memory_space<vmem>>, vector<16x128xf32>
      %36 = arith.addf %34, %35 : vector<16x128xf32>
      %c0_25 = arith.constant 0 : index
      %c0_26 = arith.constant 0 : index
      %37 = vector.load %arg9[%c0_25, %c0_26] : memref<16x128xf32, #tpu.memory_space<vmem>>, vector<16x128xf32>
      tpu.vector_store %arg9[%c0_25, %c0_26], %36 {strides = array<i32>} : memref<16x128xf32, #tpu.memory_space<vmem>>, vector<16x128xf32>,
    } else {
    }
    return
  }
  func.func @transform_0(%arg0: i32, %arg1: i32) -> (i32, i32) {
    %c0_i32 = arith.constant 0 : i32
    %c0_i32_0 = arith.constant 0 : i32
    return %arg0, %c0_i32 : i32, i32
  }
  func.func @transform_1(%arg0: i32, %arg1: i32) -> (i32, i32) {
    %c0_i32 = arith.constant 0 : i32
    %c0_i32_0 = arith.constant 0 : i32
    %c0_i32_1 = arith.constant 0 : i32
    return %c0_i32, %c0_i32_0 : i32, i32
  }
  func.func @transform_2(%arg0: i32, %arg1: i32) -> (i32, i32) {
    %c0_i32 = arith.constant 0 : i32
    %c0_i32_0 = arith.constant 0 : i32
    %c0_i32_1 = arith.constant 0 : i32
    return %c0_i32, %c0_i32_0 : i32, i32
  }
  func.func @transform_3(%arg0: i32, %arg1: i32) -> (i32, i32) {
    %c0_i32 = arith.constant 0 : i32
    %c0_i32_0 = arith.constant 0 : i32
    return %c0_i32, %arg1 : i32, i32
  }
  func.func @transform_4(%arg0: i32, %arg1: i32) -> (i32, i32) {
    %c0_i32 = arith.constant 0 : i32
    %c0_i32_0 = arith.constant 0 : i32
    return %c0_i32, %arg1 : i32, i32
  }
  func.func @transform_5(%arg0: i32, %arg1: i32) -> (i32, i32) {
    %c0_i32 = arith.constant 0 : i32
    %c0_i32_0 = arith.constant 0 : i32
    return %arg1, %c0_i32 : i32, i32
  }
  func.func @transform_6(%arg0: i32, %arg1: i32) -> (i32, i32) {
    %c0_i32 = arith.constant 0 : i32
    %c0_i32_0 = arith.constant 0 : i32
    %c0_i32_1 = arith.constant 0 : i32
    return %c0_i32, %c0_i32_0 : i32, i32
  }
  func.func @transform_7(%arg0: i32, %arg1: i32) -> (i32, i32) {
    %c0_i32 = arith.constant 0 : i32
    %c0_i32_0 = arith.constant 0 : i32
    return %arg0, %c0_i32 : i32, i32
  }
}

</mosaic_0001>

<llo_original>
// kernel: mlp_forward.1
$region0: #{mlp_forward.1}
  #allocation0 [shape = 'u32[]', space=smem, size = 0x4, offset = 0x4, fixed_abs, tag = 'smem constant byte address 0x4 - core index']
  #allocation1 [shape = 'u32[72,128]{1,0:T(1,128)}', space=vmem, size = 0x9000, scoped, tag = 'internal scratch']
  #allocation2 [shape = 'bf16[16,128]{1,0:T(8,128)(2,1)}', space=vmem, size = 0x1000, scoped, tag = 'scratch operand']
  #allocation3 [shape = 'f32[16,128]{1,0:T(8,128)}', space=vmem, size = 0x2000, scoped, tag = 'scratch operand']
  %s0 = inlined_call_operand.vmem [shape: f32[16,128], index: 0, kind: input, shape index: {}]
  %s1 = inlined_call_operand.vmem [shape: f32[1,128], index: 1, kind: input, shape index: {}]
  %s2 = inlined_call_operand.vmem [shape: f32[1,128], index: 2, kind: input, shape index: {}]
  %s3 = inlined_call_operand.hbm [shape: bf16[128,128], index: 3, kind: input, shape index: {}]
  %s4 = inlined_call_operand.vmem [shape: f32[1,128], index: 4, kind: input, shape index: {}]
  %s5 = inlined_call_operand.hbm [shape: bf16[128,128], index: 5, kind: input, shape index: {}]
  %s6 = inlined_call_operand.vmem [shape: f32[1,128], index: 6, kind: input, shape index: {}]
  %s7 = inlined_call_operand.vmem [shape: f32[16,128], index: 7, kind: output, shape index: {}]
  %s8 = sld [smem:[#allocation0]]
  $region54: #{mlp_forward.1} parent=0
    _
  %s10 = ssub.s32 1, %s8
  %s11 = scalar_select 0, %s10, %s8
  $region1: #{mlp_forward.1} parent=0
    #allocation4 [shape = 'u8[32768]{0}', space=vmem, size = 0x8000, scoped, tag = 'input window, operand 3, single buffered']
    #allocation5 [shape = 's32[1]{0}', space=sflag, size = 0x4, scoped, tag = 'scoped memory for mlp_forward.1']
    #allocation6 [shape = 'u8[32768]{0}', space=vmem, size = 0x8000, scoped, tag = 'input window, operand 5, single buffered']
    #allocation7 [shape = 's32[1]{0}', space=sflag, size = 0x4, scoped, tag = 'scoped memory for mlp_forward.1']
    %12 = vsyncpa [#allocation5], 0
    %13 = vsyncpa [#allocation7], 0
    // Predicated region
    $region2: #{mlp_forward.1} parent=1 // pred_check
      _
    $region3: #{mlp_forward.1} parent=1 // pred_check_branch
      %15 = sbr.rel (0) target = $region5
    $region4: #{mlp_forward.1} parent=1 // pred_region
      _
    $region5: #{mlp_forward.1} parent=1 // pred_fallthru
      _
    // Predicated region
    $region6: #{mlp_forward.1} parent=1 // pred_check
      _
    $region7: #{mlp_forward.1} parent=1 // pred_check_branch
      %17 = sbr.rel (0) target = $region9
    $region8: #{mlp_forward.1} parent=1 // pred_region
      _
    $region9: #{mlp_forward.1} parent=1 // pred_fallthru
      _
    // Predicated region
    $region10: #{mlp_forward.1} parent=1 // pred_check
      _
    $region11: #{mlp_forward.1} parent=1 // pred_check_branch
      %19 = sbr.rel (0) target = $region13
    $region12: #{mlp_forward.1} parent=1 // pred_region
      _
    $region13: #{mlp_forward.1} parent=1 // pred_fallthru
      _
    // Predicated region
    $region14: #{mlp_forward.1} parent=1 // pred_check
      _
    $region15: #{mlp_forward.1} parent=1 // pred_check_branch
      %21 = sbr.rel (0) target = $region17
    $region16: #{mlp_forward.1} parent=1 // pred_region
      %23 = vsyncadd [#allocation5], 0
      %s24 = sshll.u32 %s3, 4
      %s25 = int_to_ptr.hbm [resolvable:$true] %s24
      %s26 = sshll.u32 [#allocation4], 4
      %s27 = int_to_ptr.vmem [resolvable:$true] %s26
      %32 = dma.hbm_to_vmem [thread:$0]  %s25, 1024, %s27, [#allocation5], 64, 64, 4
    $region17: #{mlp_forward.1} parent=1 // pred_fallthru
      _
    // Predicated region
    $region18: #{mlp_forward.1} parent=1 // pred_check
      _
    $region19: #{mlp_forward.1} parent=1 // pred_check_branch
      %34 = sbr.rel (0) target = $region21
    $region20: #{mlp_forward.1} parent=1 // pred_region
      _
    $region21: #{mlp_forward.1} parent=1 // pred_fallthru
      _
    // Predicated region
    $region22: #{mlp_forward.1} parent=1 // pred_check
      _
    $region23: #{mlp_forward.1} parent=1 // pred_check_branch
      %36 = sbr.rel (0) target = $region25
    $region24: #{mlp_forward.1} parent=1 // pred_region
      %38 = vsyncadd [#allocation7], 0
      %s39 = sshll.u32 %s5, 4
      %s40 = int_to_ptr.hbm [resolvable:$true] %s39
      %s41 = sshll.u32 [#allocation6], 4
      %s42 = int_to_ptr.vmem [resolvable:$true] %s41
      %47 = dma.hbm_to_vmem [thread:$0]  %s40, 1024, %s42, [#allocation7], 64, 64, 4
    $region25: #{mlp_forward.1} parent=1 // pred_fallthru
      _
    // Predicated region
    $region26: #{mlp_forward.1} parent=1 // pred_check
      _
    $region27: #{mlp_forward.1} parent=1 // pred_check_branch
      %49 = sbr.rel (0) target = $region29
    $region28: #{mlp_forward.1} parent=1 // pred_region
      _
    $region29: #{mlp_forward.1} parent=1 // pred_fallthru
      _
    // Predicated region
    $region30: #{mlp_forward.1} parent=1 // pred_check
      _
    $region31: #{mlp_forward.1} parent=1 // pred_check_branch
      %51 = sbr.rel (0) target = $region33
    $region32: #{mlp_forward.1} parent=1 // pred_region
      %53 = dma.done [#allocation5], 1024
    $region33: #{mlp_forward.1} parent=1 // pred_fallthru
      _
    // Predicated region
    $region34: #{mlp_forward.1} parent=1 // pred_check
      _
    $region35: #{mlp_forward.1} parent=1 // pred_check_branch
      %55 = sbr.rel (0) target = $region37
    $region36: #{mlp_forward.1} parent=1 // pred_region
      %57 = dma.done [#allocation7], 1024
    $region37: #{mlp_forward.1} parent=1 // pred_fallthru
      _
    %p58 = scmp.eq.s32.totalorder 0, 0
    // Predicated region
    $region38: #{mlp_forward.1} parent=1 // pred_check
      %p59 = pneg %p58
    $region39: #{mlp_forward.1} parent=1 // pred_check_branch
      %61 = sbr.rel (%p59) target = $region41
    $region40: #{mlp_forward.1} parent=1 // pred_region
      %v62 = vld [vmem:[%s0] sm:$0xff]
      %v63 = vld [vmem:[%s0 + $0x8] sm:$0xff]
      %64 = vadd.xlane.f32.xlu0 %v62
      %v65 = vpop.xlane.xlu0 %64
      %66 = vadd.xlane.f32.xlu0 %v63
      %v67 = vpop.xlane.xlu0 %66
      %v68 = vmul.f32 %v65, 0.03125
      %v69 = vmul.f32 %v67, 0.03125
      %v70 = vlaneseq
      %v71 = vand.u32 %v70, 127
      %vm72 = vcmp.lt.s32.totalorder %v71, 32
      %v73 = vsub.f32 %v62, %v68
      %v74 = vsub.f32 %v63, %v69
      %v75 = vsel %vm72, %v73, 0.0
      %v76 = vsel %vm72, %v74, 0.0
      %v77 = vmul.f32 %v75, %v75
      %v78 = vmul.f32 %v76, %v76
      %79 = vadd.xlane.f32.xlu0 %v77
      %v80 = vpop.xlane.xlu0 %79
      %81 = vadd.xlane.f32.xlu0 %v78
      %v82 = vpop.xlane.xlu0 %81
      %v83 = vmul.f32 %v80, 0.03125
      %v84 = vmul.f32 %v82, 0.03125
      %v85 = vadd.f32 %v83, 1e-05
      %v86 = vadd.f32 %v84, 1e-05
      %v87 = vrsqrt.pop %v85
      %v88 = vmul.f32 %v87, %v85
      %v89 = vmul.f32 %v88, %v87
      %v90 = vmul.f32 0.5, %v89
      %v91 = vsub.f32 1.5, %v90
      %v92 = vmul.f32 %v87, %v91
      %vm93 = vweird.f32 %v85
      %vm94 = vweird.f32 %v87
      %vm95 = vmor %vm93, %vm94
      %v96 = vsel %vm95, %v87, %v92
      %v97 = vrsqrt.pop %v86
      %v98 = vmul.f32 %v97, %v86
      %v99 = vmul.f32 %v98, %v97
      %v100 = vmul.f32 0.5, %v99
      %v101 = vsub.f32 1.5, %v100
      %v102 = vmul.f32 %v97, %v101
      %vm103 = vweird.f32 %v86
      %vm104 = vweird.f32 %v97
      %vm105 = vmor %vm103, %vm104
      %v106 = vsel %vm105, %v97, %v102
      %v107 = vmul.f32 %v75, %v96
      %v108 = vmul.f32 %v76, %v106
      %v109 = vld [vmem:[%s1] sm:$0x1]
      %v111 = vperm.slane %v109, 0
      %v113 = vmul.f32 %v107, %v111
      %v114 = vmul.f32 %v108, %v111
      %v115 = vld [vmem:[%s2] sm:$0x1]
      %v117 = vperm.slane %v115, 0
      %v119 = vadd.f32 %v113, %v117
      %v120 = vadd.f32 %v114, %v117
      %v121 = vpack.c.bf16 %v119, %v119
      %v122 = vpack.c.bf16 %v120, %v120
      %123 = vst [vmem:[#allocation2] sm:$0xf] %v121
      %124 = vst [vmem:[#allocation2 + $0x4] sm:$0xf] %v122
      %125 = vst [vmem:[#allocation3] sm:$0xff] 0.0
      %126 = vst [vmem:[#allocation3 + $0x8] sm:$0xff] 0.0
    $region41: #{mlp_forward.1} parent=1 // pred_fallthru
      _
    %v127 = vld [vmem:[#allocation2] sm:$0xf]
    %v128 = vld [vmem:[#allocation2 + $0x4] sm:$0xf]
    %v129 = vld [vmem:[#allocation4] sm:$0xf]
    %v130 = vld [vmem:[#allocation4 + $0x4] sm:$0xf]
    %v131 = vld [vmem:[#allocation4 + $0x8] sm:$0xf]
    %v132 = vld [vmem:[#allocation4 + $0xc] sm:$0xf]
    %v133 = vld [vmem:[#allocation4 + $0x10] sm:$0xf]
    %v134 = vld [vmem:[#allocation4 + $0x14] sm:$0xf]
    %v135 = vld [vmem:[#allocation4 + $0x18] sm:$0xf]
    %v136 = vld [vmem:[#allocation4 + $0x1c] sm:$0xf]
    %v137 = vld [vmem:[#allocation4 + $0x20] sm:$0xf]
    %v138 = vld [vmem:[#allocation4 + $0x24] sm:$0xf]
    %v139 = vld [vmem:[#allocation4 + $0x28] sm:$0xf]
    %v140 = vld [vmem:[#allocation4 + $0x2c] sm:$0xf]
    %v141 = vld [vmem:[#allocation4 + $0x30] sm:$0xf]
    %v142 = vld [vmem:[#allocation4 + $0x34] sm:$0xf]
    %v143 = vld [vmem:[#allocation4 + $0x38] sm:$0xf]
    %v144 = vld [vmem:[#allocation4 + $0x3c] sm:$0xf]
    %v145 = vld [vmem:[%s4] sm:$0x1]
    %v147 = vperm.slane %v145, 0
    %v151 = vunpack.c.l.b16 %v127
    %v152 = vunpack.c.l.b16 %v128
    %v153 = vpack.c.b16 %v152, %v151
    %v171 = vunpack.c.l.b16 %v129
    %v172 = vunpack.c.l.b16 %v130
    %v173 = vunpack.c.l.b16 %v131
    %v174 = vunpack.c.l.b16 %v132
    %v175 = vunpack.c.l.b16 %v133
    %v176 = vunpack.c.l.b16 %v134
    %v177 = vunpack.c.l.b16 %v135
    %v178 = vunpack.c.l.b16 %v136
    %v179 = vunpack.c.l.b16 %v137
    %v180 = vunpack.c.l.b16 %v138
    %v181 = vunpack.c.l.b16 %v139
    %v182 = vunpack.c.l.b16 %v140
    %v183 = vunpack.c.l.b16 %v141
    %v184 = vunpack.c.l.b16 %v142
    %v185 = vunpack.c.l.b16 %v143
    %v186 = vunpack.c.l.b16 %v144
    %v187 = vpack.c.b16 %v172, %v171
    %v188 = vpack.c.b16 %v174, %v173
    %v189 = vpack.c.b16 %v176, %v175
    %v190 = vpack.c.b16 %v178, %v177
    %v191 = vpack.c.b16 %v180, %v179
    %v192 = vpack.c.b16 %v182, %v181
    %v193 = vpack.c.b16 %v184, %v183
    %v194 = vpack.c.b16 %v186, %v185
    %203 = vmatpush.bf16.msra.mxu0 %v194
    %204 = vmatpush.bf16.msra.mxu0 %v193
    %205 = vmatpush.bf16.msra.mxu0 %v192
    %206 = vmatpush.bf16.msra.mxu0 %v191
    %207 = vmatpush.bf16.msra.mxu0 %v190
    %208 = vmatpush.bf16.msra.mxu0 %v189
    %209 = vmatpush.bf16.msra.mxu0 %v188
    %210 = vmatpush.bf16.msra.mxu0 %v187
    %211 = vmatmul.bf16.gmra.mxu0 %v153
    %v212 = vpop.f32.mrf.mxu0
    %v213 = vadd.f32 %v147, %v212
    %v214 = vpop.f32.mrf.mxu0
    %v215 = vadd.f32 %v147, %v214
    %216 = vdwg.mxu0
    %v217 = vmul.f32 %v213, 0.5
    %v218 = vmul.f32 %v215, 0.5
    %v219 = vmul.f32 %v213, 0.044715
    %v220 = vmul.f32 %v215, 0.044715
    %v221 = vmul.f32 %v219, %v213
    %v222 = vmul.f32 %v220, %v215
    %v223 = vmul.f32 %v221, %v213
    %v224 = vmul.f32 %v222, %v215
    %v225 = vadd.f32 %v213, %v223
    %v226 = vadd.f32 %v215, %v224
    %v227 = vmul.f32 %v225, 0.7978846
    %v228 = vmul.f32 %v226, 0.7978846
    %v229 = vtanh.pop %v227
    %v230 = vtanh.pop %v228
    %v231 = vadd.f32 %v229, 1.0
    %v232 = vadd.f32 %v230, 1.0
    %v233 = vmul.f32 %v217, %v231
    %v234 = vmul.f32 %v218, %v232
    %v235 = vld [vmem:[#allocation3] sm:$0xff]
    %v236 = vld [vmem:[#allocation3 + $0x8] sm:$0xff]
    %v237 = vpack.c.bf16 %v234, %v233
    %v238 = vld [vmem:[#allocation6] sm:$0xf]
    %v239 = vld [vmem:[#allocation6 + $0x4] sm:$0xf]
    %v240 = vld [vmem:[#allocation6 + $0x8] sm:$0xf]
    %v241 = vld [vmem:[#allocation6 + $0xc] sm:$0xf]
    %v242 = vld [vmem:[#allocation6 + $0x10] sm:$0xf]
    %v243 = vld [vmem:[#allocation6 + $0x14] sm:$0xf]
    %v244 = vld [vmem:[#allocation6 + $0x18] sm:$0xf]
    %v245 = vld [vmem:[#allocation6 + $0x1c] sm:$0xf]
    %v246 = vld [vmem:[#allocation6 + $0x20] sm:$0xf]
    %v247 = vld [vmem:[#allocation6 + $0x24] sm:$0xf]
    %v248 = vld [vmem:[#allocation6 + $0x28] sm:$0xf]
    %v249 = vld [vmem:[#allocation6 + $0x2c] sm:$0xf]
    %v250 = vld [vmem:[#allocation6 + $0x30] sm:$0xf]
    %v251 = vld [vmem:[#allocation6 + $0x34] sm:$0xf]
    %v252 = vld [vmem:[#allocation6 + $0x38] sm:$0xf]
    %v253 = vld [vmem:[#allocation6 + $0x3c] sm:$0xf]
    %v270 = vunpack.c.l.b16 %v238
    %v271 = vunpack.c.l.b16 %v239
    %v272 = vunpack.c.l.b16 %v240
    %v273 = vunpack.c.l.b16 %v241
    %v274 = vunpack.c.l.b16 %v242
    %v275 = vunpack.c.l.b16 %v243
    %v276 = vunpack.c.l.b16 %v244
    %v277 = vunpack.c.l.b16 %v245
    %v278 = vunpack.c.l.b16 %v246
    %v279 = vunpack.c.l.b16 %v247
    %v280 = vunpack.c.l.b16 %v248
    %v281 = vunpack.c.l.b16 %v249
    %v282 = vunpack.c.l.b16 %v250
    %v283 = vunpack.c.l.b16 %v251
    %v284 = vunpack.c.l.b16 %v252
    %v285 = vunpack.c.l.b16 %v253
    %v286 = vpack.c.b16 %v271, %v270
    %v287 = vpack.c.b16 %v273, %v272
    %v288 = vpack.c.b16 %v275, %v274
    %v289 = vpack.c.b16 %v277, %v276
    %v290 = vpack.c.b16 %v279, %v278
    %v291 = vpack.c.b16 %v281, %v280
    %v292 = vpack.c.b16 %v283, %v282
    %v293 = vpack.c.b16 %v285, %v284
    %302 = vmatpush.bf16.msra.mxu0 %v293
    %303 = vmatpush.bf16.msra.mxu0 %v292
    %304 = vmatpush.bf16.msra.mxu0 %v291
    %305 = vmatpush.bf16.msra.mxu0 %v290
    %306 = vmatpush.bf16.msra.mxu0 %v289
    %307 = vmatpush.bf16.msra.mxu0 %v288
    %308 = vmatpush.bf16.msra.mxu0 %v287
    %309 = vmatpush.bf16.msra.mxu0 %v286
    %310 = vmatmul.bf16.gmra.mxu0 %v237
    %v311 = vpop.f32.mrf.mxu0
    %v312 = vadd.f32 0.0, %v311
    %v313 = vpop.f32.mrf.mxu0
    %v314 = vadd.f32 0.0, %v313
    %315 = vdwg.mxu0
    %v316 = vadd.f32 %v235, %v312
    %v317 = vadd.f32 %v236, %v314
    %318 = vst [vmem:[#allocation3] sm:$0xff] %v316
    %319 = vst [vmem:[#allocation3 + $0x8] sm:$0xff] %v317
    // Predicated region
    $region42: #{mlp_forward.1} parent=1 // pred_check
      %p320 = pneg %p58
    $region43: #{mlp_forward.1} parent=1 // pred_check_branch
      %322 = sbr.rel (%p320) target = $region45
    $region44: #{mlp_forward.1} parent=1 // pred_region
      %v323 = vld [vmem:[#allocation3] sm:$0xff]
      %v324 = vld [vmem:[#allocation3 + $0x8] sm:$0xff]
      %v325 = vld [vmem:[%s6] sm:$0x1]
      %v327 = vperm.slane %v325, 0
      %v329 = vadd.f32 %v323, %v327
      %v330 = vadd.f32 %v324, %v327
      %v331 = vld [vmem:[%s0] sm:$0xff]
      %v332 = vld [vmem:[%s0 + $0x8] sm:$0xff]
      %v333 = vadd.f32 %v329, %v331
      %v334 = vadd.f32 %v330, %v332
      %335 = vst [vmem:[%s7] sm:$0xff] %v333
      %336 = vst [vmem:[%s7 + $0x8] sm:$0xff] %v334
    $region45: #{mlp_forward.1} parent=1 // pred_fallthru
      _
    // Predicated region
    $region46: #{mlp_forward.1} parent=1 // pred_check
      _
    $region47: #{mlp_forward.1} parent=1 // pred_check_branch
      %338 = sbr.rel (0) target = $region49
    $region48: #{mlp_forward.1} parent=1 // pred_region
      _
    $region49: #{mlp_forward.1} parent=1 // pred_fallthru
      _
    // Predicated region
    $region50: #{mlp_forward.1} parent=1 // pred_check
      _
    $region51: #{mlp_forward.1} parent=1 // pred_check_branch
      %340 = sbr.rel (0) target = $region53
    $region52: #{mlp_forward.1} parent=1 // pred_region
      _
    $region53: #{mlp_forward.1} parent=1 // pred_fallthru
      _
    %341 = vsyncpa [#allocation5], 1
    %342 = vsyncpa [#allocation7], 1

</llo_original>
